<compile_context>
chip_gen: v7x
topology: tpu7x:2x2x1
jax: 0.10.0
libtpu: 0.0.40
codegen_flags: <defaults>
</compile_context>

<pallas_src>
import functools

import jax
import jax.numpy as jnp
from jax.experimental import pallas as pl
from jax.experimental.pallas import tpu as pltpu

_LANE = 128
_SUBLANE = 8
# VMEM budget (bytes) for the 4 pipelined data buffers
# (input tile + output tile, each double-buffered), f32 worst case.
_VMEM_DATA_BUDGET = 8 * 1024 * 1024


def _layernorm2d_kernel(x_ref, w_ref, b_ref, o_ref, *, eps, inv_c):
    # x_ref: (Bt, C, T, 128). C is a leading axis -> axis-1 reductions are
    # plain vreg adds on the VPU; the minor (T, 128) dims stay lane-dense.
    x = x_ref[...].astype(jnp.float32)

    u = jnp.sum(x, axis=1, keepdims=True) * inv_c            # (Bt, 1, T, 128)
    d = x - u
    s = jnp.sum(d * d, axis=1, keepdims=True) * inv_c        # (Bt, 1, T, 128)
    y = d * jax.lax.rsqrt(s + eps)                            # (Bt, C, T, 128)

    # Per-channel affine; weight/bias are lane-dense (1, C, 1, 128) blocks that
    # broadcast along the batch and spatial-row axes.
    o_ref[...] = (y * w_ref[...] + b_ref[...]).astype(o_ref.dtype)


def layer_norm_2d(x, weight, bias, eps: float = 1e-6):
    """x: (B, C, H, W). weight/bias: (C,). Matches PyTorch LayerNorm2d.forward."""
    B, C, H, W = x.shape
    HW = H * W

    # ---- spatial tiling: flatten H*W onto a lane-dense (rows, 128) tail -----
    rows = pl.cdiv(HW, _LANE)
    row_bytes = C * _LANE * 4                    # one (1, C, 1, 128) slab, f32
    max_rows = max(1, _VMEM_DATA_BUDGET // (4 * row_bytes))
    if max_rows >= rows:
        t_rows = rows                            # whole spatial extent per step
    else:
        t_rows = max(_SUBLANE, (max_rows // _SUBLANE) * _SUBLANE)
    num_row_tiles = -(-rows // t_rows)
    rows_pad = num_row_tiles * t_rows

    # ---- pack batch elements per grid step when the spatial tile is small ---
    bt = 1
    if num_row_tiles == 1:
        max_b = max(1, max_rows // t_rows)
        for d in range(1, B + 1):
            if B % d == 0 and d <= max_b:
                bt = d

    # ---- lane-dense reshape / zero-pad of the input --------------------------
    x_flat = x.reshape(B, C, HW)
    pad = rows_pad * _LANE - HW
    if pad:
        # Padded pixels get mean 0 / var 0 -> finite garbage, sliced off below.
        x_flat = jnp.pad(x_flat, ((0, 0), (0, 0), (0, pad)))
    x4 = x_flat.reshape(B, C, rows_pad, _LANE)

    # lane-dense per-channel affine params: (1, C, 1, 128)
    w4 = jnp.broadcast_to(weight.astype(jnp.float32).reshape(1, C, 1, 1),
                          (1, C, 1, _LANE))
    b4 = jnp.broadcast_to(bias.astype(jnp.float32).reshape(1, C, 1, 1),
                          (1, C, 1, _LANE))

    kernel = functools.partial(_layernorm2d_kernel, eps=eps, inv_c=1.0 / C)
    grid = (B // bt, num_row_tiles)

    out4 = pl.pallas_call(
        kernel,
        out_shape=jax.ShapeDtypeStruct((B, C, rows_pad, _LANE), x.dtype),
        grid=grid,
        in_specs=[
            pl.BlockSpec((bt, C, t_rows, _LANE), lambda i, j: (i, 0, j, 0)),
            pl.BlockSpec((1, C, 1, _LANE), lambda i, j: (0, 0, 0, 0)),
            pl.BlockSpec((1, C, 1, _LANE), lambda i, j: (0, 0, 0, 0)),
        ],
        out_specs=pl.BlockSpec((bt, C, t_rows, _LANE),
                               lambda i, j: (i, 0, j, 0)),
        compiler_params=pltpu.CompilerParams(
            dimension_semantics=("parallel", "parallel"),
        ),
    )(x4, w4, b4)

    out = out4.reshape(B, C, rows_pad * _LANE)
    if pad:
        out = out[:, :, :HW]
    return out.reshape(B, C, H, W)


def layer_norm_2d_ref(x, weight, bias, eps: float = 1e-6):
    """Pure-JAX reference matching the PyTorch forward exactly."""
    u = jnp.mean(x, axis=1, keepdims=True)
    s = jnp.mean((x - u) ** 2, axis=1, keepdims=True)
    xn = (x - u) / jnp.sqrt(s + eps)
    return weight[None, :, None, None] * xn + bias[None, :, None, None]


if __name__ == "__main__":
    key = jax.random.PRNGKey(0)
    kx, kw, kb = jax.random.split(key, 3)
    B, C, H, W = 2, 4, 16, 16

    x = jax.random.normal(kx, (B, C, H, W), dtype=jnp.float32)
    # Non-trivial (but deterministic) affine params to exercise the full path.
    weight = 1.0 + 0.1 * jax.random.normal(kw, (C,), dtype=jnp.float32)
    bias = 0.1 * jax.random.normal(kb, (C,), dtype=jnp.float32)

    out = jax.block_until_ready(layer_norm_2d(x, weight, bias))

    ref = layer_norm_2d_ref(x, weight, bias)
    assert out.shape == (B, C, H, W)
    assert jnp.allclose(out, ref, atol=1e-5, rtol=1e-5)

    print("KERNEL_OK")
</pallas_src>

<mosaic_0001>
module attributes {stable_mosaic.version = 11 : i64} {
  func.func @_layernorm2d_kernel(%arg0: i32, %arg1: i32, %arg2: memref<2x4x2x128xf32, #tpu.memory_space<vmem>>, %arg3: memref<1x4x1x128xf32, #tpu.memory_space<vmem>>, %arg4: memref<1x4x1x128xf32, #tpu.memory_space<vmem>>, %arg5: memref<2x4x2x128xf32, #tpu.memory_space<vmem>>) attributes {dimension_semantics = [#tpu.dimension_semantics<parallel>, #tpu.dimension_semantics<parallel>], iteration_bounds = array<i64: 1, 1>, scalar_prefetch = 0 : i64, scratch_operands = 0 : i64, tpu.core_type = #tpu.core_type<tc>, window_params = [{transform_indices = @transform_0, window_bounds = array<i64: 2, 4, 2, 128>}, {pipeline_mode = #tpu.pipeline_mode<synchronous>, transform_indices = @transform_1, window_bounds = array<i64: 1, 4, 1, 128>}, {pipeline_mode = #tpu.pipeline_mode<synchronous>, transform_indices = @transform_2, window_bounds = array<i64: 1, 4, 1, 128>}, {transform_indices = @transform_3, window_bounds = array<i64: 2, 4, 2, 128>}]} {
    %c0 = arith.constant 0 : index
    %c0_0 = arith.constant 0 : index
    %c0_1 = arith.constant 0 : index
    %c0_2 = arith.constant 0 : index
    %0 = vector.load %arg2[%c0, %c0_0, %c0_1, %c0_2] : memref<2x4x2x128xf32, #tpu.memory_space<vmem>>, vector<2x4x2x128xf32>
    %cst = arith.constant dense<0.000000e+00> : vector<2x2x128xf32>
    %1 = vector.multi_reduction <add>, %0, %cst [1] : vector<2x4x2x128xf32> to vector<2x2x128xf32>
    %2 = vector.shape_cast %1 : vector<2x2x128xf32> to vector<2x1x2x128xf32>
    %cst_3 = arith.constant 2.500000e-01 : f32
    %3 = vector.broadcast %cst_3 : f32 to vector<2x1x2x128xf32>
    %4 = arith.mulf %2, %3 : vector<2x1x2x128xf32>
    %5 = vector.broadcast %4 : vector<2x1x2x128xf32> to vector<2x4x2x128xf32>
    %6 = arith.subf %0, %5 : vector<2x4x2x128xf32>
    %7 = arith.mulf %6, %6 : vector<2x4x2x128xf32>
    %cst_4 = arith.constant dense<0.000000e+00> : vector<2x2x128xf32>
    %8 = vector.multi_reduction <add>, %7, %cst_4 [1] : vector<2x4x2x128xf32> to vector<2x2x128xf32>
    %9 = vector.shape_cast %8 : vector<2x2x128xf32> to vector<2x1x2x128xf32>
    %cst_5 = arith.constant 2.500000e-01 : f32
    %10 = vector.broadcast %cst_5 : f32 to vector<2x1x2x128xf32>
    %11 = arith.mulf %9, %10 : vector<2x1x2x128xf32>
    %cst_6 = arith.constant 9.99999997E-7 : f32
    %12 = vector.broadcast %cst_6 : f32 to vector<2x1x2x128xf32>
    %13 = arith.addf %11, %12 : vector<2x1x2x128xf32>
    %14 = math.rsqrt %13 : vector<2x1x2x128xf32>
    %15 = vector.broadcast %14 : vector<2x1x2x128xf32> to vector<2x4x2x128xf32>
    %16 = arith.mulf %6, %15 : vector<2x4x2x128xf32>
    %c0_7 = arith.constant 0 : index
    %c0_8 = arith.constant 0 : index
    %c0_9 = arith.constant 0 : index
    %c0_10 = arith.constant 0 : index
    %17 = vector.load %arg3[%c0_7, %c0_8, %c0_9, %c0_10] : memref<1x4x1x128xf32, #tpu.memory_space<vmem>>, vector<1x4x1x128xf32>
    %18 = vector.broadcast %17 : vector<1x4x1x128xf32> to vector<2x4x2x128xf32>
    %19 = arith.mulf %16, %18 : vector<2x4x2x128xf32>
    %c0_11 = arith.constant 0 : index
    %c0_12 = arith.constant 0 : index
    %c0_13 = arith.constant 0 : index
    %c0_14 = arith.constant 0 : index
    %20 = vector.load %arg4[%c0_11, %c0_12, %c0_13, %c0_14] : memref<1x4x1x128xf32, #tpu.memory_space<vmem>>, vector<1x4x1x128xf32>
    %21 = vector.broadcast %20 : vector<1x4x1x128xf32> to vector<2x4x2x128xf32>
    %22 = arith.addf %19, %21 : vector<2x4x2x128xf32>
    %c0_15 = arith.constant 0 : index
    %c0_16 = arith.constant 0 : index
    %c0_17 = arith.constant 0 : index
    %c0_18 = arith.constant 0 : index
    %23 = vector.load %arg5[%c0_15, %c0_16, %c0_17, %c0_18] : memref<2x4x2x128xf32, #tpu.memory_space<vmem>>, vector<2x4x2x128xf32>
    tpu.vector_store %arg5[%c0_15, %c0_16, %c0_17, %c0_18], %22 {strides = array<i32>} : memref<2x4x2x128xf32, #tpu.memory_space<vmem>>, vector<2x4x2x128xf32>,
    return
  }
  func.func @transform_0(%arg0: i32, %arg1: i32) -> (i32, i32, i32, i32) {
    %c0_i32 = arith.constant 0 : i32
    %c0_i32_0 = arith.constant 0 : i32
    %c0_i32_1 = arith.constant 0 : i32
    return %arg0, %c0_i32, %arg1, %c0_i32_0 : i32, i32, i32, i32
  }
  func.func @transform_1(%arg0: i32, %arg1: i32) -> (i32, i32, i32, i32) {
    %c0_i32 = arith.constant 0 : i32
    %c0_i32_0 = arith.constant 0 : i32
    %c0_i32_1 = arith.constant 0 : i32
    %c0_i32_2 = arith.constant 0 : i32
    %c0_i32_3 = arith.constant 0 : i32
    return %c0_i32, %c0_i32_0, %c0_i32_1, %c0_i32_2 : i32, i32, i32, i32
  }
  func.func @transform_2(%arg0: i32, %arg1: i32) -> (i32, i32, i32, i32) {
    %c0_i32 = arith.constant 0 : i32
    %c0_i32_0 = arith.constant 0 : i32
    %c0_i32_1 = arith.constant 0 : i32
    %c0_i32_2 = arith.constant 0 : i32
    %c0_i32_3 = arith.constant 0 : i32
    return %c0_i32, %c0_i32_0, %c0_i32_1, %c0_i32_2 : i32, i32, i32, i32
  }
  func.func @transform_3(%arg0: i32, %arg1: i32) -> (i32, i32, i32, i32) {
    %c0_i32 = arith.constant 0 : i32
    %c0_i32_0 = arith.constant 0 : i32
    %c0_i32_1 = arith.constant 0 : i32
    return %arg0, %c0_i32, %arg1, %c0_i32_0 : i32, i32, i32, i32
  }
}

</mosaic_0001>

<llo_original>
// kernel: tpu_custom_call.1
$region0: #{tpu_custom_call.1}
  #allocation0 [shape = 'u32[]', space=smem, size = 0x4, offset = 0x4, fixed_abs, tag = 'smem constant byte address 0x4 - core index']
  #allocation1 [shape = 'u32[144,128]{1,0:T(1,128)}', space=vmem, size = 0x12000, scoped, tag = 'internal scratch']
  %s0 = inlined_call_operand.hbm [shape: f32[2,4,2,128], index: 0, kind: input, shape index: {}]
  %s1 = inlined_call_operand.hbm [shape: f32[1,4,1,128], index: 1, kind: input, shape index: {}]
  %s2 = inlined_call_operand.vmem [shape: f32[1,4,1,128], index: 2, kind: input, shape index: {}]
  %s3 = inlined_call_operand.hbm [shape: f32[2,4,2,128], index: 3, kind: output, shape index: {}]
  %s4 = sld [smem:[#allocation0]]
  $region30: #{tpu_custom_call.1} parent=0
    _
  %s6 = ssub.s32 1, %s4
  %s7 = scalar_select 0, %s6, %s4
  $region1: #{tpu_custom_call.1} parent=0
    #allocation2 [shape = 'u8[8192]{0}', space=vmem, size = 0x2000, scoped, tag = 'input window, operand 0, single buffered']
    #allocation3 [shape = 's32[1]{0}', space=sflag, size = 0x4, scoped, tag = 'scoped memory for tpu_custom_call.1']
    #allocation4 [shape = 's32[1]{0}', space=sflag, size = 0x4, scoped, tag = 'scoped memory for tpu_custom_call.1']
    #allocation5 [shape = 'u8[2048]{0}', space=vmem, size = 0x800, scoped, tag = 'input window, operand 1, single buffered']
    #allocation6 [shape = 's32[1]{0}', space=sflag, size = 0x4, scoped, tag = 'scoped memory for tpu_custom_call.1']
    #allocation7 [shape = 'u8[8192]{0}', space=vmem, size = 0x2000, scoped, tag = 'output window, operand 0, single buffered']
    %8 = vsyncpa [#allocation3], 0
    %9 = vsyncpa [#allocation6], 0
    %10 = vsyncpa [#allocation4], 0
    // Predicated region
    $region2: #{tpu_custom_call.1} parent=1 // pred_check
      _
    $region3: #{tpu_custom_call.1} parent=1 // pred_check_branch
      %12 = sbr.rel (0) target = $region5
    $region4: #{tpu_custom_call.1} parent=1 // pred_region
      %s14 = ssub.s32 256, 256
      %15 = vsyncadd [#allocation3], %s14
      %s16 = sshll.u32 [#allocation2], 4
      %s17 = int_to_ptr.vmem [resolvable:$true] %s16
      %22 = dma.hbm_to_vmem [thread:$0]  %s0, 256, %s17, [#allocation3], 32, 32, 2
    $region5: #{tpu_custom_call.1} parent=1 // pred_fallthru
      _
    // Predicated region
    $region6: #{tpu_custom_call.1} parent=1 // pred_check
      _
    $region7: #{tpu_custom_call.1} parent=1 // pred_check_branch
      %24 = sbr.rel (0) target = $region9
    $region8: #{tpu_custom_call.1} parent=1 // pred_region
      %s26 = ssub.s32 64, 64
      %27 = vsyncadd [#allocation6], %s26
      %s28 = sshll.u32 [#allocation5], 4
      %s29 = int_to_ptr.vmem [resolvable:$true] %s28
      %34 = dma.hbm_to_vmem [thread:$0]  %s1, 64, %s29, [#allocation6], 16, 16, 1
    $region9: #{tpu_custom_call.1} parent=1 // pred_fallthru
      _
    // Predicated region
    $region10: #{tpu_custom_call.1} parent=1 // pred_check
      _
    $region11: #{tpu_custom_call.1} parent=1 // pred_check_branch
      %36 = sbr.rel (0) target = $region13
    $region12: #{tpu_custom_call.1} parent=1 // pred_region
      _
    $region13: #{tpu_custom_call.1} parent=1 // pred_fallthru
      _
    // Predicated region
    $region14: #{tpu_custom_call.1} parent=1 // pred_check
      _
    $region15: #{tpu_custom_call.1} parent=1 // pred_check_branch
      %38 = sbr.rel (0) target = $region17
    $region16: #{tpu_custom_call.1} parent=1 // pred_region
      %39 = dma.done [#allocation3], 256
    $region17: #{tpu_custom_call.1} parent=1 // pred_fallthru
      _
    // Predicated region
    $region18: #{tpu_custom_call.1} parent=1 // pred_check
      _
    $region19: #{tpu_custom_call.1} parent=1 // pred_check_branch
      %41 = sbr.rel (0) target = $region21
    $region20: #{tpu_custom_call.1} parent=1 // pred_region
      %42 = dma.done [#allocation6], 64
    $region21: #{tpu_custom_call.1} parent=1 // pred_fallthru
      _
    %v43 = vld [vmem:[#allocation2] sm:$0x3]
    %v44 = vld [vmem:[#allocation2 + $0x2] sm:$0x3]
    %v45 = vld [vmem:[#allocation2 + $0x4] sm:$0x3]
    %v46 = vld [vmem:[#allocation2 + $0x6] sm:$0x3]
    %v47 = vld [vmem:[#allocation2 + $0x8] sm:$0x3]
    %v48 = vld [vmem:[#allocation2 + $0xa] sm:$0x3]
    %v49 = vld [vmem:[#allocation2 + $0xc] sm:$0x3]
    %v50 = vld [vmem:[#allocation2 + $0xe] sm:$0x3]
    %vm51 = vcmask 1041408
    %v52 = vsel %vm51, %v43, 0.0
    %v53 = vsel %vm51, %v44, 0.0
    %v54 = vadd.f32 %v52, %v53
    %v55 = vsel %vm51, %v45, 0.0
    %v56 = vadd.f32 %v54, %v55
    %v57 = vsel %vm51, %v46, 0.0
    %v58 = vadd.f32 %v56, %v57
    %v59 = vsel %vm51, %v47, 0.0
    %v60 = vsel %vm51, %v48, 0.0
    %v61 = vadd.f32 %v59, %v60
    %v62 = vsel %vm51, %v49, 0.0
    %v63 = vadd.f32 %v61, %v62
    %v64 = vsel %vm51, %v50, 0.0
    %v65 = vadd.f32 %v63, %v64
    %v66 = vmul.f32 %v58, 0.25
    %v67 = vmul.f32 %v65, 0.25
    %v68 = vsub.f32 %v43, %v66
    %v69 = vsub.f32 %v44, %v66
    %v70 = vsub.f32 %v45, %v66
    %v71 = vsub.f32 %v46, %v66
    %v72 = vsub.f32 %v47, %v67
    %v73 = vsub.f32 %v48, %v67
    %v74 = vsub.f32 %v49, %v67
    %v75 = vsub.f32 %v50, %v67
    %v76 = vmul.f32 %v68, %v68
    %v77 = vmul.f32 %v69, %v69
    %v78 = vmul.f32 %v70, %v70
    %v79 = vmul.f32 %v71, %v71
    %v80 = vmul.f32 %v72, %v72
    %v81 = vmul.f32 %v73, %v73
    %v82 = vmul.f32 %v74, %v74
    %v83 = vmul.f32 %v75, %v75
    %v84 = vsel %vm51, %v76, 0.0
    %v85 = vsel %vm51, %v77, 0.0
    %v86 = vadd.f32 %v84, %v85
    %v87 = vsel %vm51, %v78, 0.0
    %v88 = vadd.f32 %v86, %v87
    %v89 = vsel %vm51, %v79, 0.0
    %v90 = vadd.f32 %v88, %v89
    %v91 = vsel %vm51, %v80, 0.0
    %v92 = vsel %vm51, %v81, 0.0
    %v93 = vadd.f32 %v91, %v92
    %v94 = vsel %vm51, %v82, 0.0
    %v95 = vadd.f32 %v93, %v94
    %v96 = vsel %vm51, %v83, 0.0
    %v97 = vadd.f32 %v95, %v96
    %v98 = vmul.f32 %v90, 0.25
    %v99 = vmul.f32 %v97, 0.25
    %v100 = vadd.f32 %v98, 1e-06
    %v101 = vadd.f32 %v99, 1e-06
    %v102 = vrsqrt.pop %v100
    %v103 = vrsqrt.pop %v101
    %v104 = vmul.f32 %v68, %v102
    %v105 = vmul.f32 %v69, %v102
    %v106 = vmul.f32 %v70, %v102
    %v107 = vmul.f32 %v71, %v102
    %v108 = vmul.f32 %v72, %v103
    %v109 = vmul.f32 %v73, %v103
    %v110 = vmul.f32 %v74, %v103
    %v111 = vmul.f32 %v75, %v103
    %v112 = vld [vmem:[#allocation5] sm:$0x1]
    %v113 = vld [vmem:[#allocation5 + $0x1] sm:$0x1]
    %v114 = vld [vmem:[#allocation5 + $0x2] sm:$0x1]
    %v115 = vld [vmem:[#allocation5 + $0x3] sm:$0x1]
    %v120 = vlaneseq
    %v121 = vshrl.u32 %v120, 7
    %v122 = vsub.s32 0, %v121
    %v123 = vrot.slane %v112, %v122
    %v124 = vlaneseq
    %v125 = vshrl.u32 %v124, 7
    %v126 = vsub.s32 0, %v125
    %v127 = vrot.slane %v113, %v126
    %v128 = vlaneseq
    %v129 = vshrl.u32 %v128, 7
    %v130 = vsub.s32 0, %v129
    %v131 = vrot.slane %v114, %v130
    %v132 = vlaneseq
    %v133 = vshrl.u32 %v132, 7
    %v134 = vsub.s32 0, %v133
    %v135 = vrot.slane %v115, %v134
    %v140 = vmul.f32 %v104, %v123
    %v141 = vmul.f32 %v105, %v127
    %v142 = vmul.f32 %v106, %v131
    %v143 = vmul.f32 %v107, %v135
    %v144 = vmul.f32 %v108, %v123
    %v145 = vmul.f32 %v109, %v127
    %v146 = vmul.f32 %v110, %v131
    %v147 = vmul.f32 %v111, %v135
    %v148 = vld [vmem:[%s2] sm:$0x1]
    %v149 = vld [vmem:[%s2 + $0x1] sm:$0x1]
    %v150 = vld [vmem:[%s2 + $0x2] sm:$0x1]
    %v151 = vld [vmem:[%s2 + $0x3] sm:$0x1]
    %v156 = vlaneseq
    %v157 = vshrl.u32 %v156, 7
    %v158 = vsub.s32 0, %v157
    %v159 = vrot.slane %v148, %v158
    %v160 = vlaneseq
    %v161 = vshrl.u32 %v160, 7
    %v162 = vsub.s32 0, %v161
    %v163 = vrot.slane %v149, %v162
    %v164 = vlaneseq
    %v165 = vshrl.u32 %v164, 7
    %v166 = vsub.s32 0, %v165
    %v167 = vrot.slane %v150, %v166
    %v168 = vlaneseq
    %v169 = vshrl.u32 %v168, 7
    %v170 = vsub.s32 0, %v169
    %v171 = vrot.slane %v151, %v170
    %v176 = vadd.f32 %v140, %v159
    %v177 = vadd.f32 %v141, %v163
    %v178 = vadd.f32 %v142, %v167
    %v179 = vadd.f32 %v143, %v171
    %v180 = vadd.f32 %v144, %v159
    %v181 = vadd.f32 %v145, %v163
    %v182 = vadd.f32 %v146, %v167
    %v183 = vadd.f32 %v147, %v171
    %184 = vst [vmem:[#allocation7] sm:$0x3] %v176
    %185 = vst [vmem:[#allocation7 + $0x2] sm:$0x3] %v177
    %186 = vst [vmem:[#allocation7 + $0x4] sm:$0x3] %v178
    %187 = vst [vmem:[#allocation7 + $0x6] sm:$0x3] %v179
    %188 = vst [vmem:[#allocation7 + $0x8] sm:$0x3] %v180
    %189 = vst [vmem:[#allocation7 + $0xa] sm:$0x3] %v181
    %190 = vst [vmem:[#allocation7 + $0xc] sm:$0x3] %v182
    %191 = vst [vmem:[#allocation7 + $0xe] sm:$0x3] %v183
    // Predicated region
    $region22: #{tpu_custom_call.1} parent=1 // pred_check
      _
    $region23: #{tpu_custom_call.1} parent=1 // pred_check_branch
      %193 = sbr.rel (0) target = $region25
    $region24: #{tpu_custom_call.1} parent=1 // pred_region
      %s195 = ssub.s32 256, 256
      %196 = vsyncadd [#allocation4], %s195
      %s197 = sshll.u32 [#allocation7], 4
      %s198 = int_to_ptr.vmem [resolvable:$true] %s197
      %203 = dma.vmem_to_hbm [thread:$0]  %s198, 256, %s3, [#allocation4], 32, 32, 2
    $region25: #{tpu_custom_call.1} parent=1 // pred_fallthru
      _
    // Predicated region
    $region26: #{tpu_custom_call.1} parent=1 // pred_check
      _
    $region27: #{tpu_custom_call.1} parent=1 // pred_check_branch
      %205 = sbr.rel (0) target = $region29
    $region28: #{tpu_custom_call.1} parent=1 // pred_region
      %206 = dma.done [#allocation4], 256
    $region29: #{tpu_custom_call.1} parent=1 // pred_fallthru
      _
    %207 = vsyncpa [#allocation3], 1
    %208 = vsyncpa [#allocation6], 1
    %209 = vsyncpa [#allocation4], 1

</llo_original>
